<compile_context>
chip_gen: v6e
topology: v6e:2x2x1
jax: 0.10.0
libtpu: 0.0.40
codegen_flags: <defaults>
</compile_context>

<pallas_src>
import functools

import jax
import jax.numpy as jnp
from jax.experimental import pallas as pl
from jax.experimental.pallas import tpu as pltpu


def _default_exp_dtype():
    """bf16 exp on chips with a bf16 EUP (v6e/v7x); f32 on v5e and older."""
    try:
        kind = jax.devices()[0].device_kind.lower()
    except Exception:
        return jnp.float32
    if any(v in kind for v in ("v2", "v3", "v4", "v5")):
        return jnp.float32
    return jnp.bfloat16


def _pick_tq(N):
    """Query-stripe size: 256/128 when they divide N, else the largest
    divisor of N (preferring multiples of 8) not exceeding 256."""
    for cand in (256, 128):
        if N % cand == 0:
            return cand
    divs = [d for d in range(1, min(N, 256) + 1) if N % d == 0]
    mult8 = [d for d in divs if d % 8 == 0]
    if mult8:
        return max(mult8)
    return max(divs)


def _round_up(x, m):
    return -(-x // m) * m


def _vmem_estimate(N, C, Cqk, tq, attn_isize, return_attention):
    """Rough per-step VMEM footprint (double-buffered blocks + live temps)."""
    lane = lambda n: _round_up(max(n, 1), 128)
    blocks = 2 * (
        _round_up(tq, 16) * lane(Cqk) * 2      # q stripe (bf16)
        + _round_up(Cqk, 16) * lane(N) * 2     # k, lane-dense (bf16)
        + _round_up(N, 16) * lane(C) * 2       # v (bf16)
        + _round_up(tq, 8) * lane(C) * 4       # x residual stripe (f32)
        + _round_up(tq, 8) * lane(C) * 4       # out stripe (f32)
    )
    if return_attention:
        blocks += 2 * _round_up(tq, 8) * lane(N) * attn_isize
    temps = 4 * _round_up(tq, 8) * lane(N) * 4  # energy / exp / attn + slack
    return blocks + temps


_VMEM_SHRINK_BUDGET = 40 * 1024 * 1024


def _self_attn_kernel(q_ref, k_ref, v_ref, x_ref, gamma_ref, out_ref,
                      *attn_refs, exp_dtype):
    # q_ref:     (1, TQ, Cqk) bf16 query stripe
    # k_ref:     (1, Cqk, N)  bf16 keys, lane-dense, fully resident
    # v_ref:     (1, N, C)    bf16 values, fully resident
    # x_ref:     (1, TQ, C)   f32 residual stripe
    # gamma_ref: (1,)         f32 scalar in SMEM
    # out_ref:   (1, TQ, C)   f32 output stripe
    # attn_refs: optional ((1, TQ, N),) attention stripe (bf16 by default)

    # energy[i, j] = Q[i] . K[:, j]  -- plain (TQ,Cqk)@(Cqk,N) MXU matmul,
    # bf16 inputs, f32 accumulation, lane-dense RHS (no transpose).
    energy = jnp.dot(q_ref[0], k_ref[0],
                     preferred_element_type=jnp.float32)        # (TQ, N) f32

    # Exact softmax over the FULL key axis (keys fully resident, no online
    # rescaling needed).  exp in bf16 on v6e/v7x (EUP bf16), f32 on v5e.
    m = jnp.max(energy, axis=-1, keepdims=True)
    e = jnp.exp((energy - m).astype(exp_dtype))                 # (TQ, N)
    denom = jnp.sum(e.astype(jnp.float32), axis=-1, keepdims=True)
    inv = pl.reciprocal(denom)                                  # exact, EUP
    # Single cast: attention is produced directly in bf16 and reused for both
    # the attn@V matmul input and the attention-map store.
    attn = (e * inv.astype(e.dtype)).astype(jnp.bfloat16)       # (TQ, N) bf16

    # out[i, c] = sum_j attn[i, j] * v[j, c]
    o = jnp.dot(attn, v_ref[0], preferred_element_type=jnp.float32)  # (TQ, C)

    gamma = gamma_ref[0]                                        # SMEM scalar
    out_ref[0] = gamma * o + x_ref[0]
    if attn_refs:
        attn_refs[0][0] = attn.astype(attn_refs[0].dtype)


def self_attn_forward(x_nchw, wq, bq, wk, bk, wv, bv, gamma, *, tq=None,
                      attn_dtype=jnp.bfloat16, return_attention=True,
                      exp_dtype=None):
    """x_nchw: (B, C, H, W) f32.

    Returns (out (B,C,H,W) f32, attention (B,N,N) attn_dtype) when
    return_attention=True, else just out.
    """
    B, C, H, W = x_nchw.shape
    N = H * W
    Cqk = wq.shape[1]

    if exp_dtype is None:
        exp_dtype = _default_exp_dtype()

    attn_isize = jnp.dtype(attn_dtype).itemsize
    auto_tq = tq is None
    if auto_tq:
        tq = _pick_tq(N)
        # Shrink the auto-picked stripe if the per-step footprint gets large
        # (keeps the kernel inside scoped VMEM on v7x at big feature maps).
        while (tq % 2 == 0 and tq > 8 and
               _vmem_estimate(N, C, Cqk, tq, attn_isize, return_attention)
               > _VMEM_SHRINK_BUDGET):
            tq //= 2
    assert N % tq == 0, "tq must divide N = H*W"
    nq = N // tq

    # ---- Hoisted QKV projection (the 1x1 convs are per-pixel matmuls). ----
    # Tiny vs the O(N^2) attention work; running it as plain XLA matmuls
    # removes the in-kernel scratch-fill dependency on the query axis.
    x_cn = x_nchw.reshape(B, C, N)                                  # (B, C, N)
    q = (jnp.einsum('ck,bcn->bnk', wq, x_cn) + bq[None]
         ).astype(jnp.bfloat16)                                     # (B, N, Cqk)
    # Keys lane-dense: (B, Cqk, N).
    k = (jnp.einsum('ck,bcn->bkn', wk, x_cn) + bk.T[None]
         ).astype(jnp.bfloat16)                                     # (B, Cqk, N)
    v = (jnp.einsum('ck,bcn->bnk', wv, x_cn) + bv[None]
         ).astype(jnp.bfloat16)                                     # (B, N, C)
    x_flat = jnp.transpose(x_cn, (0, 2, 1))                         # (B, N, C)
    gamma_s = jnp.reshape(gamma, (1,)).astype(jnp.float32)

    out_shapes = [jax.ShapeDtypeStruct((B, N, C), jnp.float32)]
    out_specs = [pl.BlockSpec((1, tq, C), lambda b, s: (b, s, 0))]
    if return_attention:
        out_shapes.append(jax.ShapeDtypeStruct((B, N, N), attn_dtype))
        out_specs.append(pl.BlockSpec((1, tq, N), lambda b, s: (b, s, 0)))

    est = _vmem_estimate(N, C, Cqk, tq, attn_isize, return_attention)
    vmem_limit = int(min(48 * 1024 * 1024, max(32 * 1024 * 1024, est)))

    cost = pl.CostEstimate(
        flops=2 * B * N * N * (Cqk + C),
        transcendentals=B * N * N,
        bytes_accessed=(B * N * (2 * Cqk + C) * 2 + B * N * C * 8
                        + (B * N * N * attn_isize if return_attention else 0)),
    )

    kernel = functools.partial(_self_attn_kernel, exp_dtype=exp_dtype)

    results = pl.pallas_call(
        kernel,
        out_shape=tuple(out_shapes),
        grid_spec=pltpu.PrefetchScalarGridSpec(
            num_scalar_prefetch=0,
            grid=(B, nq),
            in_specs=[
                # Query stripe, changes every step.
                pl.BlockSpec((1, tq, Cqk), lambda b, s: (b, s, 0)),
                # Keys / values: full per batch element; block index constant
                # over the stripe axis, so they are only re-DMA'd when b changes.
                pl.BlockSpec((1, Cqk, N), lambda b, s: (b, 0, 0)),
                pl.BlockSpec((1, N, C), lambda b, s: (b, 0, 0)),
                # Residual stripe (no full-x residency).
                pl.BlockSpec((1, tq, C), lambda b, s: (b, s, 0)),
                # gamma: scalar on the SMEM path, not a VMEM tile.
                pl.BlockSpec(memory_space=pltpu.MemorySpace.SMEM),
            ],
            out_specs=tuple(out_specs),
        ),
        compiler_params=pltpu.CompilerParams(
            # No cross-step dependencies left -> both axes parallel (v7x 2 TCs).
            dimension_semantics=("parallel", "parallel"),
            vmem_limit_bytes=vmem_limit,
        ),
        cost_estimate=cost,
    )(q, k, v, x_flat, gamma_s)

    if return_attention:
        out_flat, attn = results
    else:
        (out_flat,) = results
        attn = None

    # (B, N, C) -> (B, C, H, W)
    out_nchw = jnp.transpose(out_flat, (0, 2, 1)).reshape(B, C, H, W)
    if return_attention:
        return out_nchw, attn
    return out_nchw


def reference_forward(x_nchw, wq, bq, wk, bk, wv, bv, gamma):
    """Pure-JAX reference mirroring the PyTorch module semantics."""
    B, C, H, W = x_nchw.shape
    x_flat = x_nchw.reshape(B, C, H * W)                            # (B, C, N)
    q = jnp.einsum('bcn,ck->bkn', x_flat, wq) + bq.T[None, :, :]    # (B, Cqk, N)
    k = jnp.einsum('bcn,ck->bkn', x_flat, wk) + bk.T[None, :, :]
    v = jnp.einsum('bcn,ck->bkn', x_flat, wv) + bv.T[None, :, :]    # (B, C, N)
    energy = jnp.einsum('bki,bkj->bij', q, k)                       # (B, N, N)
    attn = jax.nn.softmax(energy, axis=-1)
    out = jnp.einsum('bcj,bij->bci', v, attn).reshape(B, C, H, W)
    return jnp.reshape(gamma, ()) * out + x_nchw, attn


if __name__ == "__main__":
    # in_dim = 16 -> query/key dim = 2; N = 256.
    B, C, H, W = 2, 16, 16, 16
    Cqk = C // 8
    N = H * W

    key = jax.random.PRNGKey(0)
    kx, k1, k2, k3, k4, k5, k6 = jax.random.split(key, 7)

    x = jax.random.normal(kx, (B, C, H, W), dtype=jnp.float32)

    # 1x1-conv weights stored as (Cin, Cout); biases as (1, Cout).
    wq = jax.random.normal(k1, (C, Cqk), dtype=jnp.float32) * 0.1
    bq = jax.random.normal(k2, (1, Cqk), dtype=jnp.float32) * 0.1
    wk = jax.random.normal(k3, (C, Cqk), dtype=jnp.float32) * 0.1
    bk = jax.random.normal(k4, (1, Cqk), dtype=jnp.float32) * 0.1
    wv = jax.random.normal(k5, (C, C), dtype=jnp.float32) * 0.1
    bv = jax.random.normal(k6, (1, C), dtype=jnp.float32) * 0.1
    # The module initializes gamma to zero; use a nonzero value so the
    # gamma * out + x path is actually exercised by the check.
    gamma = jnp.array([0.5], dtype=jnp.float32)

    out_ref, attn_ref = reference_forward(x, wq, bq, wk, bk, wv, bv, gamma)

    # tq=128 -> grid (B, 2): exercises the query-stripe tiling explicitly.
    out, attn = self_attn_forward(x, wq, bq, wk, bk, wv, bv, gamma, tq=128)
    jax.block_until_ready((out, attn))

    assert out.shape == (B, C, H, W)
    assert attn.shape == (B, N, N)
    # bf16 matmul inputs, bf16 exp (on v6e/v7x), bf16 attention output
    # -> loosened tolerances vs the f32 reference.
    assert jnp.allclose(out, out_ref, atol=2e-2, rtol=2e-2)
    assert jnp.allclose(attn.astype(jnp.float32), attn_ref, atol=5e-3, rtol=5e-2)

    # Attention-elided path (skips the N^2 HBM writeback entirely).
    out_only = self_attn_forward(x, wq, bq, wk, bk, wv, bv, gamma,
                                 return_attention=False)
    jax.block_until_ready(out_only)
    assert jnp.allclose(out_only, out_ref, atol=2e-2, rtol=2e-2)

    print("KERNEL_OK")
</pallas_src>

<mosaic_0001>
module attributes {stable_mosaic.version = 11 : i64} {
  func.func @_self_attn_kernel(%arg0: i32, %arg1: i32, %arg2: memref<1x128x2xbf16, #tpu.memory_space<vmem>>, %arg3: memref<1x2x256xbf16, #tpu.memory_space<vmem>>, %arg4: memref<1x256x16xbf16, #tpu.memory_space<vmem>>, %arg5: memref<1x128x16xf32, #tpu.memory_space<vmem>>, %arg6: memref<1xf32, #tpu.memory_space<smem>>, %arg7: memref<1x128x16xf32, #tpu.memory_space<vmem>>, %arg8: memref<1x128x256xbf16, #tpu.memory_space<vmem>>) attributes {dimension_semantics = [#tpu.dimension_semantics<parallel>, #tpu.dimension_semantics<parallel>], iteration_bounds = array<i64: 2, 2>, scalar_prefetch = 0 : i64, scratch_operands = 0 : i64, tpu.core_type = #tpu.core_type<tc>, window_params = [{transform_indices = @transform_0, window_bounds = array<i64: 1, 128, 2>}, {transform_indices = @transform_1, window_bounds = array<i64: 1, 2, 256>}, {transform_indices = @transform_2, window_bounds = array<i64: 1, 256, 16>}, {transform_indices = @transform_3, window_bounds = array<i64: 1, 128, 16>}, {transform_indices = @transform_4, window_bounds = array<i64: 1>}, {transform_indices = @transform_5, window_bounds = array<i64: 1, 128, 16>}, {transform_indices = @transform_6, window_bounds = array<i64: 1, 128, 256>}]} {
    %c0 = arith.constant 0 : index
    %c0_0 = arith.constant 0 : index
    %c0_1 = arith.constant 0 : index
    %0 = vector.load %arg2[%c0, %c0_0, %c0_1] : memref<1x128x2xbf16, #tpu.memory_space<vmem>>, vector<1x128x2xbf16>
    %1 = vector.shape_cast %0 : vector<1x128x2xbf16> to vector<128x2xbf16>
    %c0_2 = arith.constant 0 : index
    %c0_3 = arith.constant 0 : index
    %c0_4 = arith.constant 0 : index
    %2 = vector.load %arg3[%c0_2, %c0_3, %c0_4] : memref<1x2x256xbf16, #tpu.memory_space<vmem>>, vector<1x2x256xbf16>
    %3 = vector.shape_cast %2 : vector<1x2x256xbf16> to vector<2x256xbf16>
    %cst = arith.constant dense<0.000000e+00> : vector<128x256xf32>
    %4 = tpu.matmul %1, %3, %cst {dimension_numbers = #tpu.dot_dimension_numbers<[1], [0], [0], [1], [0, 0, 1, 1], [], []>} : vector<128x2xbf16>, vector<2x256xbf16>, vector<128x256xf32> -> vector<128x256xf32>
    %cst_5 = arith.constant dense<0xFF800000> : vector<128xf32>
    %5 = vector.multi_reduction <maximumf>, %4, %cst_5 [1] : vector<128x256xf32> to vector<128xf32>
    %6 = vector.shape_cast %5 : vector<128xf32> to vector<128x1xf32>
    %7 = vector.broadcast %6 : vector<128x1xf32> to vector<128x256xf32>
    %8 = arith.subf %4, %7 : vector<128x256xf32>
    %9 = arith.truncf %8 : vector<128x256xf32> to vector<128x256xbf16>
    %10 = math.exp %9 : vector<128x256xbf16>
    %11 = arith.extf %10 : vector<128x256xbf16> to vector<128x256xf32>
    %cst_6 = arith.constant dense<0.000000e+00> : vector<128xf32>
    %12 = vector.multi_reduction <add>, %11, %cst_6 [1] : vector<128x256xf32> to vector<128xf32>
    %13 = vector.shape_cast %12 : vector<128xf32> to vector<128x1xf32>
    %14 = tpu.reciprocal %13 : vector<128x1xf32> -> vector<128x1xf32>
    %15 = arith.truncf %14 : vector<128x1xf32> to vector<128x1xbf16>
    %16 = vector.broadcast %15 : vector<128x1xbf16> to vector<128x256xbf16>
    %17 = arith.mulf %10, %16 : vector<128x256xbf16>
    %c0_7 = arith.constant 0 : index
    %c0_8 = arith.constant 0 : index
    %c0_9 = arith.constant 0 : index
    %18 = vector.load %arg4[%c0_7, %c0_8, %c0_9] : memref<1x256x16xbf16, #tpu.memory_space<vmem>>, vector<1x256x16xbf16>
    %19 = vector.shape_cast %18 : vector<1x256x16xbf16> to vector<256x16xbf16>
    %cst_10 = arith.constant dense<0.000000e+00> : vector<128x16xf32>
    %20 = tpu.matmul %17, %19, %cst_10 {dimension_numbers = #tpu.dot_dimension_numbers<[1], [0], [0], [1], [0, 0, 1, 1], [], []>} : vector<128x256xbf16>, vector<256x16xbf16>, vector<128x16xf32> -> vector<128x16xf32>
    %c0_11 = arith.constant 0 : index
    %21 = memref.load %arg6[%c0_11] : memref<1xf32, #tpu.memory_space<smem>>
    %22 = vector.broadcast %21 : f32 to vector<128x16xf32>
    %23 = arith.mulf %22, %20 : vector<128x16xf32>
    %c0_12 = arith.constant 0 : index
    %c0_13 = arith.constant 0 : index
    %c0_14 = arith.constant 0 : index
    %24 = vector.load %arg5[%c0_12, %c0_13, %c0_14] : memref<1x128x16xf32, #tpu.memory_space<vmem>>, vector<1x128x16xf32>
    %25 = vector.shape_cast %24 : vector<1x128x16xf32> to vector<128x16xf32>
    %26 = arith.addf %23, %25 : vector<128x16xf32>
    %c0_15 = arith.constant 0 : index
    %c0_16 = arith.constant 0 : index
    %c0_17 = arith.constant 0 : index
    %27 = vector.load %arg7[%c0_15, %c0_16, %c0_17] : memref<1x128x16xf32, #tpu.memory_space<vmem>>, vector<1x128x16xf32>
    %28 = vector.shape_cast %27 : vector<1x128x16xf32> to vector<128x16xf32>
    %29 = vector.shape_cast %26 : vector<128x16xf32> to vector<1x128x16xf32>
    tpu.vector_store %arg7[%c0_15, %c0_16, %c0_17], %29 {strides = array<i32>} : memref<1x128x16xf32, #tpu.memory_space<vmem>>, vector<1x128x16xf32>,
    %c0_18 = arith.constant 0 : index
    %c0_19 = arith.constant 0 : index
    %c0_20 = arith.constant 0 : index
    %30 = vector.load %arg8[%c0_18, %c0_19, %c0_20] : memref<1x128x256xbf16, #tpu.memory_space<vmem>>, vector<1x128x256xbf16>
    %31 = vector.shape_cast %30 : vector<1x128x256xbf16> to vector<128x256xbf16>
    %32 = vector.shape_cast %17 : vector<128x256xbf16> to vector<1x128x256xbf16>
    tpu.vector_store %arg8[%c0_18, %c0_19, %c0_20], %32 {strides = array<i32>} : memref<1x128x256xbf16, #tpu.memory_space<vmem>>, vector<1x128x256xbf16>,
    return
  }
  func.func @transform_0(%arg0: i32, %arg1: i32) -> (i32, i32, i32) {
    %c0_i32 = arith.constant 0 : i32
    %c0_i32_0 = arith.constant 0 : i32
    return %arg0, %arg1, %c0_i32 : i32, i32, i32
  }
  func.func @transform_1(%arg0: i32, %arg1: i32) -> (i32, i32, i32) {
    %c0_i32 = arith.constant 0 : i32
    %c0_i32_0 = arith.constant 0 : i32
    %c0_i32_1 = arith.constant 0 : i32
    return %arg0, %c0_i32, %c0_i32_0 : i32, i32, i32
  }
  func.func @transform_2(%arg0: i32, %arg1: i32) -> (i32, i32, i32) {
    %c0_i32 = arith.constant 0 : i32
    %c0_i32_0 = arith.constant 0 : i32
    %c0_i32_1 = arith.constant 0 : i32
    return %arg0, %c0_i32, %c0_i32_0 : i32, i32, i32
  }
  func.func @transform_3(%arg0: i32, %arg1: i32) -> (i32, i32, i32) {
    %c0_i32 = arith.constant 0 : i32
    %c0_i32_0 = arith.constant 0 : i32
    return %arg0, %arg1, %c0_i32 : i32, i32, i32
  }
  func.func @transform_4(%arg0: i32, %arg1: i32) -> i32 {
    %c0_i32 = arith.constant 0 : i32
    %c0_i32_0 = arith.constant 0 : i32
    return %c0_i32 : i32
  }
  func.func @transform_5(%arg0: i32, %arg1: i32) -> (i32, i32, i32) {
    %c0_i32 = arith.constant 0 : i32
    %c0_i32_0 = arith.constant 0 : i32
    return %arg0, %arg1, %c0_i32 : i32, i32, i32
  }
  func.func @transform_6(%arg0: i32, %arg1: i32) -> (i32, i32, i32) {
    %c0_i32 = arith.constant 0 : i32
    %c0_i32_0 = arith.constant 0 : i32
    return %arg0, %arg1, %c0_i32 : i32, i32, i32
  }
}

</mosaic_0001>

<llo_original>
// kernel: tpu_custom_call.1
$region0: #{tpu_custom_call.1}
  #allocation0 [shape = 'u32[]', space=smem, size = 0x4, offset = 0x4, fixed_abs, tag = 'smem constant byte address 0x4 - core index']
  #allocation1 [shape = 'u32[144,128]{1,0:T(1,128)}', space=vmem, size = 0x12000, scoped, tag = 'internal scratch']
  #allocation2 [shape = 'f32[1]{0:T(128)S(6)}', space=smem, size = 0x200, scoped, tag = 'scoped memory for tpu_custom_call.1']
  %s0 = inlined_call_operand.vmem [shape: bf16[2,256,2], index: 0, kind: input, shape index: {}]
  %s1 = inlined_call_operand.vmem [shape: bf16[2,2,256], index: 1, kind: input, shape index: {}]
  %s2 = inlined_call_operand.vmem [shape: bf16[2,256,16], index: 2, kind: input, shape index: {}]
  %s3 = inlined_call_operand.vmem [shape: f32[2,256,16], index: 3, kind: input, shape index: {}]
  %s4 = inlined_call_operand.<no memory space> [shape: f32[1], index: 4, kind: input, shape index: {}]
  %s5 = inlined_call_operand.vmem [shape: f32[2,256,16], index: 5, kind: output, shape index: {0}]
  %s6 = inlined_call_operand.hbm [shape: bf16[2,256,256], index: 6, kind: output, shape index: {1}]
  %7 = xla_tuple %s5, %s6
  %s8 = sld [smem:[#allocation0]]
  $region61: #{tpu_custom_call.1} parent=0
    _
  %s10 = ssub.s32 1, %s8
  %s11 = scalar_select 0, %s10, %s8
  %12 = sst [smem:[#allocation2]] %s4
  $region1: #{tpu_custom_call.1} parent=0
    #allocation3 [shape = 'u8[131072]{0}', space=vmem, size = 0x20000, scoped, tag = 'output window, operand 1']
    #allocation4 [shape = 's32[2]{0}', space=sflag, size = 0x8, scoped, tag = 'scoped memory for tpu_custom_call.1']
    %13 = vsyncpa [#allocation4], 0
    %s14 = scalar_lea.sflag [#allocation4], 1
    %15 = vsyncpa %s14, 0
    loop: start=0, step=1, limit=6
    $region2: #{tpu_custom_call.1} parent=1 // loop_pre_header
      _
    $region3: #{tpu_custom_call.1} parent=1 // loop_header
      %s17 = sphi 0, %s21
      %p18 = scmp.ge.s32.totalorder %s17, 6
      %s24 = sphi 0, %s36
      %s25 = sphi 0, %s32
      %s26 = sphi 0, %s24
      %s27 = sphi 0, %s25
      %s28 = sphi 0, %s26
      %s29 = sphi 0, %s27
      %s41 = sphi 0, %s43
      %s44 = sphi 0, %s41
      %s45 = sphi 0, %s44
      %s61 = sphi 0, %s45
      %s67 = sphi 0, %s69
      %s70 = sphi 0, %s67
      %s71 = sphi 0, %s70
      %s87 = sphi 0, %s71
      %s93 = sphi 0, %s95
      %s96 = sphi 0, %s93
      %s97 = sphi 0, %s96
      %s113 = sphi 0, %s97
      %s121 = sphi 0, %s123
      %s124 = sphi 0, %s121
      %s125 = sphi 0, %s124
      %s141 = sphi 0, %s125
      %s145 = sphi 0, %s145
      %s147 = sphi 0, %s145
      %s148 = sphi 0, %s147
      %s162 = sphi 0, %s148
      %s170 = sphi 0, %s172
      %s173 = sphi 0, %s170
      %s174 = sphi 0, %s173
      %s190 = sphi 0, %s174
      %s198 = sphi 0, %s200
      %s201 = sphi 0, %s198
      %s202 = sphi 0, %s201
      %s218 = sphi 0, %s202
    $region4: #{tpu_custom_call.1} parent=1 // loop_header_branch
      %20 = sbr.rel (%p18) target = $region8
    $region5: #{tpu_custom_call.1} parent=1 // loop_body
      %s22 = ssub.s32 %s17, 1
      %s23 = ssub.s32 %s17, 2
      %s30 = sadd.s32 1, %s25
      %p31 = scmp.ge.s32.totalorder %s30, 2
      %s32 = scalar_select %p31, 0, %s30
      %s33 = sadd.s32 1, %s24
      %s34 = scalar_select %p31, %s33, %s24
      %p35 = scmp.ge.s32.totalorder %s34, 2
      %s36 = scalar_select %p35, 0, %s34
      %s37 = ssub.s32 %s24, %s36
      %s38 = ssub.s32 %s25, %s32
      %s39 = sor.u32 %s37, %s38
      %p40 = scmp.eq.s32.totalorder %s39, 0
      %s42 = sadd.s32 %s41, 1
      %s43 = scalar_select %p40, %s41, %s42
      %p46 = pneg %p40
      %p47 = scmp.eq.s32.totalorder %s17, 3
      %p48 = por %p46, %p47
      %p49 = scmp.ne.s32.totalorder %s41, %s44
      %p50 = scmp.eq.s32.totalorder %s17, 0
      %p51 = por %p49, %p50
      %p52 = scmp.ne.s32.totalorder %s41, %s44
      %p53 = scmp.eq.s32.totalorder %s22, 3
      %p54 = por %p52, %p53
      %p55 = scmp.ne.s32.totalorder %s44, %s45
      %p56 = scmp.eq.s32.totalorder %s22, 0
      %p57 = por %p55, %p56
      %p58 = scmp.ne.s32.totalorder %s44, %s45
      %p59 = scmp.eq.s32.totalorder %s23, 3
      %p60 = por %p58, %p59
      %p62 = scmp.ne.s32.totalorder %s45, %s61
      %p63 = scmp.eq.s32.totalorder %s23, 0
      %p64 = por %p62, %p63
      %s65 = ssub.s32 %s24, %s36
      %p66 = scmp.eq.s32.totalorder %s65, 0
      %s68 = sadd.s32 %s67, 1
      %s69 = scalar_select %p66, %s67, %s68
      %p72 = pneg %p66
      %p73 = scmp.eq.s32.totalorder %s17, 3
      %p74 = por %p72, %p73
      %p75 = scmp.ne.s32.totalorder %s67, %s70
      %p76 = scmp.eq.s32.totalorder %s17, 0
      %p77 = por %p75, %p76
      %p78 = scmp.ne.s32.totalorder %s67, %s70
      %p79 = scmp.eq.s32.totalorder %s22, 3
      %p80 = por %p78, %p79
      %p81 = scmp.ne.s32.totalorder %s70, %s71
      %p82 = scmp.eq.s32.totalorder %s22, 0
      %p83 = por %p81, %p82
      %p84 = scmp.ne.s32.totalorder %s70, %s71
      %p85 = scmp.eq.s32.totalorder %s23, 3
      %p86 = por %p84, %p85
      %p88 = scmp.ne.s32.totalorder %s71, %s87
      %p89 = scmp.eq.s32.totalorder %s23, 0
      %p90 = por %p88, %p89
      %s91 = ssub.s32 %s24, %s36
      %p92 = scmp.eq.s32.totalorder %s91, 0
      %s94 = sadd.s32 %s93, 1
      %s95 = scalar_select %p92, %s93, %s94
      %p98 = pneg %p92
      %p99 = scmp.eq.s32.totalorder %s17, 3
      %p100 = por %p98, %p99
      %p101 = scmp.ne.s32.totalorder %s93, %s96
      %p102 = scmp.eq.s32.totalorder %s17, 0
      %p103 = por %p101, %p102
      %p104 = scmp.ne.s32.totalorder %s93, %s96
      %p105 = scmp.eq.s32.totalorder %s22, 3
      %p106 = por %p104, %p105
      %p107 = scmp.ne.s32.totalorder %s96, %s97
      %p108 = scmp.eq.s32.totalorder %s22, 0
      %p109 = por %p107, %p108
      %p110 = scmp.ne.s32.totalorder %s96, %s97
      %p111 = scmp.eq.s32.totalorder %s23, 3
      %p112 = por %p110, %p111
      %p114 = scmp.ne.s32.totalorder %s97, %s113
      %p115 = scmp.eq.s32.totalorder %s23, 0
      %p116 = por %p114, %p115
      %s117 = ssub.s32 %s24, %s36
      %s118 = ssub.s32 %s25, %s32
      %s119 = sor.u32 %s117, %s118
      %p120 = scmp.eq.s32.totalorder %s119, 0
      %s122 = sadd.s32 %s121, 1
      %s123 = scalar_select %p120, %s121, %s122
      %p126 = pneg %p120
      %p127 = scmp.eq.s32.totalorder %s17, 3
      %p128 = por %p126, %p127
      %p129 = scmp.ne.s32.totalorder %s121, %s124
      %p130 = scmp.eq.s32.totalorder %s17, 0
      %p131 = por %p129, %p130
      %p132 = scmp.ne.s32.totalorder %s121, %s124
      %p133 = scmp.eq.s32.totalorder %s22, 3
      %p134 = por %p132, %p133
      %p135 = scmp.ne.s32.totalorder %s124, %s125
      %p136 = scmp.eq.s32.totalorder %s22, 0
      %p137 = por %p135, %p136
      %p138 = scmp.ne.s32.totalorder %s124, %s125
      %p139 = scmp.eq.s32.totalorder %s23, 3
      %p140 = por %p138, %p139
      %p142 = scmp.ne.s32.totalorder %s125, %s141
      %p143 = scmp.eq.s32.totalorder %s23, 0
      %p144 = por %p142, %p143
      %s146 = sadd.s32 %s145, 1
      %p149 = scmp.eq.s32.totalorder %s17, 3
      %p150 = scmp.ne.s32.totalorder %s145, %s147
      %p151 = scmp.eq.s32.totalorder %s17, 0
      %p152 = por %p150, %p151
      %p153 = scmp.ne.s32.totalorder %s145, %s147
      %p154 = scmp.eq.s32.totalorder %s22, 3
      %p155 = por %p153, %p154
      %p156 = scmp.ne.s32.totalorder %s147, %s148
      %p157 = scmp.eq.s32.totalorder %s22, 0
      %p158 = por %p156, %p157
      %p159 = scmp.ne.s32.totalorder %s147, %s148
      %p160 = scmp.eq.s32.totalorder %s23, 3
      %p161 = por %p159, %p160
      %p163 = scmp.ne.s32.totalorder %s148, %s162
      %p164 = scmp.eq.s32.totalorder %s23, 0
      %p165 = por %p163, %p164
      %s166 = ssub.s32 %s24, %s36
      %s167 = ssub.s32 %s25, %s32
      %s168 = sor.u32 %s166, %s167
      %p169 = scmp.eq.s32.totalorder %s168, 0
      %s171 = sadd.s32 %s170, 1
      %s172 = scalar_select %p169, %s170, %s171
      %p175 = pneg %p169
      %p176 = scmp.eq.s32.totalorder %s17, 3
      %p177 = por %p175, %p176
      %p178 = scmp.ne.s32.totalorder %s170, %s173
      %p179 = scmp.eq.s32.totalorder %s17, 0
      %p180 = por %p178, %p179
      %p181 = scmp.ne.s32.totalorder %s170, %s173
      %p182 = scmp.eq.s32.totalorder %s22, 3
      %p183 = por %p181, %p182
      %p184 = scmp.ne.s32.totalorder %s173, %s174
      %p185 = scmp.eq.s32.totalorder %s22, 0
      %p186 = por %p184, %p185
      %p187 = scmp.ne.s32.totalorder %s173, %s174
      %p188 = scmp.eq.s32.totalorder %s23, 3
      %p189 = por %p187, %p188
      %p191 = scmp.ne.s32.totalorder %s174, %s190
      %p192 = scmp.eq.s32.totalorder %s23, 0
      %p193 = por %p191, %p192
      %s194 = ssub.s32 %s24, %s36
      %s195 = ssub.s32 %s25, %s32
      %s196 = sor.u32 %s194, %s195
      %p197 = scmp.eq.s32.totalorder %s196, 0
      %s199 = sadd.s32 %s198, 1
      %s200 = scalar_select %p197, %s198, %s199
      %p203 = pneg %p197
      %p204 = scmp.eq.s32.totalorder %s17, 3
      %p205 = por %p203, %p204
      %p206 = scmp.ne.s32.totalorder %s198, %s201
      %p207 = scmp.eq.s32.totalorder %s17, 0
      %p208 = por %p206, %p207
      %p209 = scmp.ne.s32.totalorder %s198, %s201
      %p210 = scmp.eq.s32.totalorder %s22, 3
      %p211 = por %p209, %p210
      %p212 = scmp.ne.s32.totalorder %s201, %s202
      %p213 = scmp.eq.s32.totalorder %s22, 0
      %p214 = por %p212, %p213
      %p215 = scmp.ne.s32.totalorder %s201, %s202
      %p216 = scmp.eq.s32.totalorder %s23, 3
      %p217 = por %p215, %p216
      %p219 = scmp.ne.s32.totalorder %s202, %s218
      %p220 = scmp.eq.s32.totalorder %s23, 0
      %p221 = por %p219, %p220
      %p222 = scmp.le.s32.totalorder 1, %s17
      %p223 = scmp.lt.s32.totalorder %s17, 5
      %p224 = pnand %p222, %p223
      %p225 = pneg %p224
      // Predicated region
      $region9: #{tpu_custom_call.1} parent=5 // pred_check
        _
      $region10: #{tpu_custom_call.1} parent=5 // pred_check_branch
        %227 = sbr.rel (%p224) target = $region12
      $region11: #{tpu_custom_call.1} parent=5 // pred_region
        %s228 = ssub.s32 %s17, 1
        // Predicated region
        $region13: #{tpu_custom_call.1} parent=11 // pred_check
          %p229 = pneg %p158
        $region14: #{tpu_custom_call.1} parent=11 // pred_check_branch
          %231 = sbr.rel (%p229) target = $region16
        $region15: #{tpu_custom_call.1} parent=11 // pred_region
          _
        $region16: #{tpu_custom_call.1} parent=11 // pred_fallthru
          _
      $region12: #{tpu_custom_call.1} parent=5 // pred_fallthru
        _
      %p232 = scmp.lt.s32.totalorder %s17, 4
      // Predicated region
      $region17: #{tpu_custom_call.1} parent=5 // pred_check
        %p233 = pneg %p232
      $region18: #{tpu_custom_call.1} parent=5 // pred_check_branch
        %235 = sbr.rel (%p233) target = $region20
      $region19: #{tpu_custom_call.1} parent=5 // pred_region
        // Predicated region
        $region21: #{tpu_custom_call.1} parent=19 // pred_check
          %p236 = pneg %p51
        $region22: #{tpu_custom_call.1} parent=19 // pred_check_branch
          %238 = sbr.rel (%p236) target = $region24
        $region23: #{tpu_custom_call.1} parent=19 // pred_region
          %s239 = smul.u32 16, %s25
          %p240 = scmp.lt.s32.totalorder %s24, 1
          %s241 = scalar_select %p240, %s24, 1
          %p242 = scmp.lt.s32.totalorder %s239, 31
          %s243 = scalar_select %p242, %s239, 31
          %s244 = smul.addr %s241, 32
          %s245 = sadd.s32 %s243, %s244
          %s246 = smul.addr %s245, 4
          %s247 = scalar_lea.vmem %s0, %s246
          %s248 = smul.u32 16, %s25
        $region24: #{tpu_custom_call.1} parent=19 // pred_fallthru
          _
        // Predicated region
        $region25: #{tpu_custom_call.1} parent=19 // pred_check
          %p249 = pneg %p77
        $region26: #{tpu_custom_call.1} parent=19 // pred_check_branch
          %251 = sbr.rel (%p249) target = $region28
        $region27: #{tpu_custom_call.1} parent=19 // pred_region
          %p252 = scmp.lt.s32.totalorder %s24, 1
          %s253 = scalar_select %p252, %s24, 1
          %s254 = smul.addr %s253, 2
          %s255 = scalar_lea.vmem %s1, %s254
        $region28: #{tpu_custom_call.1} parent=19 // pred_fallthru
          _
        // Predicated region
        $region29: #{tpu_custom_call.1} parent=19 // pred_check
          %p256 = pneg %p103
        $region30: #{tpu_custom_call.1} parent=19 // pred_check_branch
          %258 = sbr.rel (%p256) target = $region32
        $region31: #{tpu_custom_call.1} parent=19 // pred_region
          %p259 = scmp.lt.s32.totalorder %s24, 1
          %s260 = scalar_select %p259, %s24, 1
          %s261 = smul.addr %s260, 32
          %s262 = smul.addr %s261, 4
          %s263 = scalar_lea.vmem %s2, %s262
        $region32: #{tpu_custom_call.1} parent=19 // pred_fallthru
          _
        // Predicated region
        $region33: #{tpu_custom_call.1} parent=19 // pred_check
          %p264 = pneg %p131
        $region34: #{tpu_custom_call.1} parent=19 // pred_check_branch
          %266 = sbr.rel (%p264) target = $region36
        $region35: #{tpu_custom_call.1} parent=19 // pred_region
          %s267 = smul.u32 16, %s25
          %p268 = scmp.lt.s32.totalorder %s24, 1
          %s269 = scalar_select %p268, %s24, 1
          %p270 = scmp.lt.s32.totalorder %s267, 31
          %s271 = scalar_select %p270, %s267, 31
          %s272 = smul.addr %s269, 32
          %s273 = sadd.s32 %s271, %s272
          %s274 = smul.addr %s273, 8
          %s275 = scalar_lea.vmem %s3, %s274
          %s276 = smul.u32 16, %s25
        $region36: #{tpu_custom_call.1} parent=19 // pred_fallthru
          _
      $region20: #{tpu_custom_call.1} parent=5 // pred_fallthru
        _
      %p277 = scmp.le.s32.totalorder 1, %s17
      %p278 = scmp.lt.s32.totalorder %s17, 5
      %p279 = pnand %p277, %p278
      %p280 = pneg %p279
      // Predicated region
      $region37: #{tpu_custom_call.1} parent=5 // pred_check
        _
      $region38: #{tpu_custom_call.1} parent=5 // pred_check_branch
        %282 = sbr.rel (%p279) target = $region40
      $region39: #{tpu_custom_call.1} parent=5 // pred_region
        %s283 = ssub.s32 %s17, 1
        %s284 = smul.u32 16, %s27
        %p285 = scmp.lt.s32.totalorder %s26, 1
        %s286 = scalar_select %p285, %s26, 1
        %p287 = scmp.lt.s32.totalorder %s284, 31
        %s288 = scalar_select %p287, %s284, 31
        %s289 = smul.addr %s286, 32
        %s290 = sadd.s32 %s288, %s289
        %s291 = smul.addr %s290, 4
        %s292 = scalar_lea.vmem %s0, %s291
        %p293 = pneg %p57
        %p294 = pneg %p54
        %p295 = scmp.lt.s32.totalorder %s26, 1
        %s296 = scalar_select %p295, %s26, 1
        %s297 = smul.addr %s296, 2
        %s298 = scalar_lea.vmem %s1, %s297
        %p299 = pneg %p83
        %p300 = pneg %p80
        %p301 = scmp.lt.s32.totalorder %s26, 1
        %s302 = scalar_select %p301, %s26, 1
        %s303 = smul.addr %s302, 32
        %s304 = smul.addr %s303, 4
        %s305 = scalar_lea.vmem %s2, %s304
        %p306 = pneg %p109
        %p307 = pneg %p106
        %s308 = smul.u32 16, %s27
        %p309 = scmp.lt.s32.totalorder %s26, 1
        %s310 = scalar_select %p309, %s26, 1
        %p311 = scmp.lt.s32.totalorder %s308, 31
        %s312 = scalar_select %p311, %s308, 31
        %s313 = smul.addr %s310, 32
        %s314 = sadd.s32 %s312, %s313
        %s315 = smul.addr %s314, 8
        %s316 = scalar_lea.vmem %s3, %s315
        %p317 = pneg %p137
        %p318 = pneg %p134
        %p319 = pneg %p158
        %p320 = pneg %p155
        %p321 = pneg %p186
        %p322 = pneg %p183
        %s323 = smul.u32 16, %s27
        %p324 = scmp.lt.s32.totalorder %s26, 1
        %s325 = scalar_select %p324, %s26, 1
        %p326 = scmp.lt.s32.totalorder %s323, 31
        %s327 = scalar_select %p326, %s323, 31
        %s328 = smul.addr %s325, 32
        %s329 = sadd.s32 %s327, %s328
        %s330 = smul.addr %s329, 8
        %s331 = scalar_lea.vmem %s5, %s330
        %p332 = pneg %p214
        %p333 = pneg %p211
        %s334 = sand.u32 %s201, 1
        %s335 = scalar_lea.sflag [#allocation4], %s334
        %s336 = sand.u32 %s201, 1
        %s337 = smul.addr %s336, 128
        %s338 = scalar_lea.vmem [#allocation3], %s337
        %s339 = smul.u32 16, %s27
        %p340 = scmp.lt.s32.totalorder %s26, 1
        %s341 = scalar_select %p340, %s26, 1
        %p342 = scmp.lt.s32.totalorder %s339, 31
        %s343 = scalar_select %p342, %s339, 31
        %s344 = smul.addr %s341, 32
        %s345 = sadd.s32 %s343, %s344
        %s346 = smul.addr %s345, 4
        %s347 = scalar_lea.vmem %s0, %s346
        %s348 = smul.u32 16, %s27
        %p349 = scmp.lt.s32.totalorder %s26, 1
        %s350 = scalar_select %p349, %s26, 1
        %s351 = smul.addr %s350, 2
        %s352 = scalar_lea.vmem %s1, %s351
        %p353 = scmp.lt.s32.totalorder %s26, 1
        %s354 = scalar_select %p353, %s26, 1
        %s355 = smul.addr %s354, 32
        %s356 = smul.addr %s355, 4
        %s357 = scalar_lea.vmem %s2, %s356
        %s358 = smul.u32 16, %s27
        %p359 = scmp.lt.s32.totalorder %s26, 1
        %s360 = scalar_select %p359, %s26, 1
        %p361 = scmp.lt.s32.totalorder %s358, 31
        %s362 = scalar_select %p361, %s358, 31
        %s363 = smul.addr %s360, 32
        %s364 = sadd.s32 %s362, %s363
        %s365 = smul.addr %s364, 8
        %s366 = scalar_lea.vmem %s3, %s365
        %s367 = smul.u32 16, %s27
        %s368 = smul.u32 16, %s27
        %p369 = scmp.lt.s32.totalorder %s26, 1
        %s370 = scalar_select %p369, %s26, 1
        %p371 = scmp.lt.s32.totalorder %s368, 31
        %s372 = scalar_select %p371, %s368, 31
        %s373 = smul.addr %s370, 32
        %s374 = sadd.s32 %s372, %s373
        %s375 = smul.addr %s374, 8
        %s376 = scalar_lea.vmem %s5, %s375
        %s377 = smul.u32 16, %s27
        %s378 = smul.u32 16, %s27
        %v380 = vld [vmem:[%s347] sm:$0xf]
        %v381 = vld [vmem:[%s347 + $0x4] sm:$0xf]
        %v382 = vld [vmem:[%s347 + $0x8] sm:$0xf]
        %v383 = vld [vmem:[%s347 + $0xc] sm:$0xf]
        %v384 = vld [vmem:[%s347 + $0x10] sm:$0xf]
        %v385 = vld [vmem:[%s347 + $0x14] sm:$0xf]
        %v386 = vld [vmem:[%s347 + $0x18] sm:$0xf]
        %v387 = vld [vmem:[%s347 + $0x1c] sm:$0xf]
        %v388 = vld [vmem:[%s347 + $0x20] sm:$0xf]
        %v389 = vld [vmem:[%s347 + $0x24] sm:$0xf]
        %v390 = vld [vmem:[%s347 + $0x28] sm:$0xf]
        %v391 = vld [vmem:[%s347 + $0x2c] sm:$0xf]
        %v392 = vld [vmem:[%s347 + $0x30] sm:$0xf]
        %v393 = vld [vmem:[%s347 + $0x34] sm:$0xf]
        %v394 = vld [vmem:[%s347 + $0x38] sm:$0xf]
        %v395 = vld [vmem:[%s347 + $0x3c] sm:$0xf]
        %v396 = vld [vmem:[%s352] sm:$0x3]
        %v413 = vunpack.c.l.b16 %v380
        %v414 = vunpack.c.l.b16 %v381
        %v415 = vunpack.c.l.b16 %v382
        %v416 = vunpack.c.l.b16 %v383
        %v417 = vunpack.c.l.b16 %v384
        %v418 = vunpack.c.l.b16 %v385
        %v419 = vunpack.c.l.b16 %v386
        %v420 = vunpack.c.l.b16 %v387
        %v421 = vunpack.c.l.b16 %v388
        %v422 = vunpack.c.l.b16 %v389
        %v423 = vunpack.c.l.b16 %v390
        %v424 = vunpack.c.l.b16 %v391
        %v425 = vunpack.c.l.b16 %v392
        %v426 = vunpack.c.l.b16 %v393
        %v427 = vunpack.c.l.b16 %v394
        %v428 = vunpack.c.l.b16 %v395
        %v429 = vpack.c.b16 %v414, %v413
        %v430 = vpack.c.b16 %v416, %v415
        %v431 = vpack.c.b16 %v418, %v417
        %v432 = vpack.c.b16 %v420, %v419
        %v433 = vpack.c.b16 %v422, %v421
        %v434 = vpack.c.b16 %v424, %v423
        %v435 = vpack.c.b16 %v426, %v425
        %v436 = vpack.c.b16 %v428, %v427
        %v439 = vunpack.c.l.s4 1966171168
        %v440 = vunpack.c.0.s8 %v439
        %v441 = vlaneseq
        %v442 = vshrl.u32 %v441, 7
        %v443 = vsub.s32 %v440, %v442
        %v444 = vrot.slane %v396, %v443
        %v445 = vcombine.high %v444, %v444
        %v447 = vunpack.c.l.s4 1966171168
        %v448 = vunpack.c.0.s8 %v447
        %v449 = vlaneseq
        %v450 = vshrl.u32 %v449, 7
        %v451 = vsub.s32 %v448, %v450
        %v452 = vrot.slane %v444, %v451
        %v454 = vunpack.c.l.s4 1966171168
        %v455 = vunpack.c.0.s8 %v454
        %v456 = vlaneseq
        %v457 = vshrl.u32 %v456, 7
        %v458 = vsub.s32 %v455, %v457
        %v459 = vrot.slane %v445, %v458
        %vm460 = vcmask 15360
        %v462 = vsel %vm460, %v429, 0
        %v465 = vsel %vm460, %v430, 0
        %v468 = vsel %vm460, %v431, 0
        %v471 = vsel %vm460, %v432, 0
        %v474 = vsel %vm460, %v433, 0
        %v477 = vsel %vm460, %v434, 0
        %v480 = vsel %vm460, %v435, 0
        %v483 = vsel %vm460, %v436, 0
        %vm485 = vcmask 1040384
        %v487 = vsel %vm485, %v452, 0
        %v490 = vsel %vm485, %v459, 0
        %492 = vmatprep.subr.bf16.mxu0 0
        %493 = vmatpush1.bf16.msra.mxu0 0
        %494 = vmatprep.subr.bf16.mxu0 0
        %495 = vmatpush1.bf16.msra.mxu0 0
        %496 = vmatprep.subr.bf16.mxu0 0
        %497 = vmatpush1.bf16.msra.mxu0 0
        %498 = vmatprep.subr.bf16.mxu0 0
        %499 = vmatpush1.bf16.msra.mxu0 0
        %500 = vmatprep.subr.bf16.mxu0 0
        %501 = vmatpush1.bf16.msra.mxu0 0
        %502 = vmatprep.subr.bf16.mxu0 0
        %503 = vmatpush1.bf16.msra.mxu0 0
        %504 = vmatprep.subr.bf16.mxu0 0
        %505 = vmatpush1.bf16.msra.mxu0 0
        %506 = vmatprep.subr.bf16.mxu0 %v490
        %507 = vmatpush1.bf16.msra.mxu0 %v487
        %508 = vmatprep.subr.bf16.mxu0 0
        %509 = vmatpush2.bf16.msra.mxu0 0
        %510 = vmatprep.subr.bf16.mxu0 0
        %511 = vmatpush2.bf16.msra.mxu0 0
        %512 = vmatprep.subr.bf16.mxu0 0
        %513 = vmatpush2.bf16.msra.mxu0 0
        %514 = vmatprep.subr.bf16.mxu0 0
        %515 = vmatpush2.bf16.msra.mxu0 0
        %516 = vmatprep.subr.bf16.mxu0 0
        %517 = vmatpush2.bf16.msra.mxu0 0
        %518 = vmatprep.subr.bf16.mxu0 0
        %519 = vmatpush2.bf16.msra.mxu0 0
        %520 = vmatprep.subr.bf16.mxu0 0
        %521 = vmatpush2.bf16.msra.mxu0 0
        %522 = vmatprep.subr.bf16.mxu0 0
        %523 = vmatpush2.bf16.msra.mxu0 0
        %524 = vmatprep.mubr.bf16.mxu0 0
        %525 = vmatmul.mubr.bf16.gmra.mxu0 %v462
        %v526 = vpop.f32.mrf.mxu0
        %v527 = vadd.f32 0.0, %v526
        %v528 = vpop.f32.mrf.mxu0
        %v529 = vadd.f32 0.0, %v528
        %v530 = vpop.f32.mrf.mxu0
        %v531 = vadd.f32 0.0, %v530
        %v532 = vpop.f32.mrf.mxu0
        %v533 = vadd.f32 0.0, %v532
        %534 = vmatprep.mubr.bf16.mxu0 0
        %535 = vmatmul.mubr.bf16.gmra.mxu0 %v465
        %v536 = vpop.f32.mrf.mxu0
        %v537 = vadd.f32 0.0, %v536
        %v538 = vpop.f32.mrf.mxu0
        %v539 = vadd.f32 0.0, %v538
        %v540 = vpop.f32.mrf.mxu0
        %v541 = vadd.f32 0.0, %v540
        %v542 = vpop.f32.mrf.mxu0
        %v543 = vadd.f32 0.0, %v542
        %544 = vmatprep.mubr.bf16.mxu0 0
        %545 = vmatmul.mubr.bf16.gmra.mxu0 %v468
        %v546 = vpop.f32.mrf.mxu0
        %v547 = vadd.f32 0.0, %v546
        %v548 = vpop.f32.mrf.mxu0
        %v549 = vadd.f32 0.0, %v548
        %v550 = vpop.f32.mrf.mxu0
        %v551 = vadd.f32 0.0, %v550
        %v552 = vpop.f32.mrf.mxu0
        %v553 = vadd.f32 0.0, %v552
        %554 = vmatprep.mubr.bf16.mxu0 0
        %555 = vmatmul.mubr.bf16.gmra.mxu0 %v471
        %v556 = vpop.f32.mrf.mxu0
        %v557 = vadd.f32 0.0, %v556
        %v558 = vpop.f32.mrf.mxu0
        %v559 = vadd.f32 0.0, %v558
        %v560 = vpop.f32.mrf.mxu0
        %v561 = vadd.f32 0.0, %v560
        %v562 = vpop.f32.mrf.mxu0
        %v563 = vadd.f32 0.0, %v562
        %564 = vmatprep.mubr.bf16.mxu0 0
        %565 = vmatmul.mubr.bf16.gmra.mxu0 %v474
        %v566 = vpop.f32.mrf.mxu0
        %v567 = vadd.f32 0.0, %v566
        %v568 = vpop.f32.mrf.mxu0
        %v569 = vadd.f32 0.0, %v568
        %v570 = vpop.f32.mrf.mxu0
        %v571 = vadd.f32 0.0, %v570
        %v572 = vpop.f32.mrf.mxu0
        %v573 = vadd.f32 0.0, %v572
        %574 = vmatprep.mubr.bf16.mxu0 0
        %575 = vmatmul.mubr.bf16.gmra.mxu0 %v477
        %v576 = vpop.f32.mrf.mxu0
        %v577 = vadd.f32 0.0, %v576
        %v578 = vpop.f32.mrf.mxu0
        %v579 = vadd.f32 0.0, %v578
        %v580 = vpop.f32.mrf.mxu0
        %v581 = vadd.f32 0.0, %v580
        %v582 = vpop.f32.mrf.mxu0
        %v583 = vadd.f32 0.0, %v582
        %584 = vmatprep.mubr.bf16.mxu0 0
        %585 = vmatmul.mubr.bf16.gmra.mxu0 %v480
        %v586 = vpop.f32.mrf.mxu0
        %v587 = vadd.f32 0.0, %v586
        %v588 = vpop.f32.mrf.mxu0
        %v589 = vadd.f32 0.0, %v588
        %v590 = vpop.f32.mrf.mxu0
        %v591 = vadd.f32 0.0, %v590
        %v592 = vpop.f32.mrf.mxu0
        %v593 = vadd.f32 0.0, %v592
        %594 = vmatprep.mubr.bf16.mxu0 0
        %595 = vmatmul.mubr.bf16.gmra.mxu0 %v483
        %v596 = vpop.f32.mrf.mxu0
        %v597 = vadd.f32 0.0, %v596
        %v598 = vpop.f32.mrf.mxu0
        %v599 = vadd.f32 0.0, %v598
        %v600 = vpop.f32.mrf.mxu0
        %v601 = vadd.f32 0.0, %v600
        %v602 = vpop.f32.mrf.mxu0
        %v603 = vadd.f32 0.0, %v602
        %604 = vdwg.mxu0
        %v605 = vmax.f32 %v527, %v529
        %606 = vmax.xlane.f32.xlu0 %v605
        %v607 = vpop.xlane.xlu0 %606
        %v608 = vmax.f32 %v531, %v533
        %609 = vmax.xlane.f32.xlu0 %v608
        %v610 = vpop.xlane.xlu0 %609
        %v611 = vmax.f32 %v537, %v539
        %612 = vmax.xlane.f32.xlu0 %v611
        %v613 = vpop.xlane.xlu0 %612
        %v614 = vmax.f32 %v541, %v543
        %615 = vmax.xlane.f32.xlu0 %v614
        %v616 = vpop.xlane.xlu0 %615
        %v617 = vmax.f32 %v547, %v549
        %618 = vmax.xlane.f32.xlu0 %v617
        %v619 = vpop.xlane.xlu0 %618
        %v620 = vmax.f32 %v551, %v553
        %621 = vmax.xlane.f32.xlu0 %v620
        %v622 = vpop.xlane.xlu0 %621
        %v623 = vmax.f32 %v557, %v559
        %624 = vmax.xlane.f32.xlu0 %v623
        %v625 = vpop.xlane.xlu0 %624
        %v626 = vmax.f32 %v561, %v563
        %627 = vmax.xlane.f32.xlu0 %v626
        %v628 = vpop.xlane.xlu0 %627
        %v629 = vmax.f32 %v567, %v569
        %630 = vmax.xlane.f32.xlu0 %v629
        %v631 = vpop.xlane.xlu0 %630
        %v632 = vmax.f32 %v571, %v573
        %633 = vmax.xlane.f32.xlu0 %v632
        %v634 = vpop.xlane.xlu0 %633
        %v635 = vmax.f32 %v577, %v579
        %636 = vmax.xlane.f32.xlu0 %v635
        %v637 = vpop.xlane.xlu0 %636
        %v638 = vmax.f32 %v581, %v583
        %639 = vmax.xlane.f32.xlu0 %v638
        %v640 = vpop.xlane.xlu0 %639
        %v641 = vmax.f32 %v587, %v589
        %642 = vmax.xlane.f32.xlu0 %v641
        %v643 = vpop.xlane.xlu0 %642
        %v644 = vmax.f32 %v591, %v593
        %645 = vmax.xlane.f32.xlu0 %v644
        %v646 = vpop.xlane.xlu0 %645
        %v647 = vmax.f32 %v597, %v599
        %648 = vmax.xlane.f32.xlu0 %v647
        %v649 = vpop.xlane.xlu0 %648
        %v650 = vmax.f32 %v601, %v603
        %651 = vmax.xlane.f32.xlu0 %v650
        %v652 = vpop.xlane.xlu0 %651
        %v653 = vsub.f32 %v527, %v607
        %v654 = vsub.f32 %v529, %v607
        %v655 = vsub.f32 %v531, %v610
        %v656 = vsub.f32 %v533, %v610
        %v657 = vsub.f32 %v537, %v613
        %v658 = vsub.f32 %v539, %v613
        %v659 = vsub.f32 %v541, %v616
        %v660 = vsub.f32 %v543, %v616
        %v661 = vsub.f32 %v547, %v619
        %v662 = vsub.f32 %v549, %v619
        %v663 = vsub.f32 %v551, %v622
        %v664 = vsub.f32 %v553, %v622
        %v665 = vsub.f32 %v557, %v625
        %v666 = vsub.f32 %v559, %v625
        %v667 = vsub.f32 %v561, %v628
        %v668 = vsub.f32 %v563, %v628
        %v669 = vsub.f32 %v567, %v631
        %v670 = vsub.f32 %v569, %v631
        %v671 = vsub.f32 %v571, %v634
        %v672 = vsub.f32 %v573, %v634
        %v673 = vsub.f32 %v577, %v637
        %v674 = vsub.f32 %v579, %v637
        %v675 = vsub.f32 %v581, %v640
        %v676 = vsub.f32 %v583, %v640
        %v677 = vsub.f32 %v587, %v643
        %v678 = vsub.f32 %v589, %v643
        %v679 = vsub.f32 %v591, %v646
        %v680 = vsub.f32 %v593, %v646
        %v681 = vsub.f32 %v597, %v649
        %v682 = vsub.f32 %v599, %v649
        %v683 = vsub.f32 %v601, %v652
        %v684 = vsub.f32 %v603, %v652
        %v685 = vpack.c.bf16 %v655, %v653
        %v686 = vpack.c.bf16 %v656, %v654
        %v687 = vpack.c.bf16 %v659, %v657
        %v688 = vpack.c.bf16 %v660, %v658
        %v689 = vpack.c.bf16 %v663, %v661
        %v690 = vpack.c.bf16 %v664, %v662
        %v691 = vpack.c.bf16 %v667, %v665
        %v692 = vpack.c.bf16 %v668, %v666
        %v693 = vpack.c.bf16 %v671, %v669
        %v694 = vpack.c.bf16 %v672, %v670
        %v695 = vpack.c.bf16 %v675, %v673
        %v696 = vpack.c.bf16 %v676, %v674
        %v697 = vpack.c.bf16 %v679, %v677
        %v698 = vpack.c.bf16 %v680, %v678
        %v699 = vpack.c.bf16 %v683, %v681
        %v700 = vpack.c.bf16 %v684, %v682
        %v702 = vmul.bf16 %v685, 1069105081
        %v703 = vpow.bf16.pop %v702
        %v705 = vmul.bf16 %v686, 1069105081
        %v706 = vpow.bf16.pop %v705
        %v708 = vmul.bf16 %v687, 1069105081
        %v709 = vpow.bf16.pop %v708
        %v711 = vmul.bf16 %v688, 1069105081
        %v712 = vpow.bf16.pop %v711
        %v714 = vmul.bf16 %v689, 1069105081
        %v715 = vpow.bf16.pop %v714
        %v717 = vmul.bf16 %v690, 1069105081
        %v718 = vpow.bf16.pop %v717
        %v720 = vmul.bf16 %v691, 1069105081
        %v721 = vpow.bf16.pop %v720
        %v723 = vmul.bf16 %v692, 1069105081
        %v724 = vpow.bf16.pop %v723
        %v726 = vmul.bf16 %v693, 1069105081
        %v727 = vpow.bf16.pop %v726
        %v729 = vmul.bf16 %v694, 1069105081
        %v730 = vpow.bf16.pop %v729
        %v732 = vmul.bf16 %v695, 1069105081
        %v733 = vpow.bf16.pop %v732
        %v735 = vmul.bf16 %v696, 1069105081
        %v736 = vpow.bf16.pop %v735
        %v738 = vmul.bf16 %v697, 1069105081
        %v739 = vpow.bf16.pop %v738
        %v741 = vmul.bf16 %v698, 1069105081
        %v742 = vpow.bf16.pop %v741
        %v744 = vmul.bf16 %v699, 1069105081
        %v745 = vpow.bf16.pop %v744
        %v747 = vmul.bf16 %v700, 1069105081
        %v748 = vpow.bf16.pop %v747
        %v749 = vunpack.c.l.bf16 %v703
        %v750 = vunpack.c.l.bf16 %v706
        %v751 = vunpack.c.h.bf16 %v703
        %v752 = vunpack.c.h.bf16 %v706
        %v753 = vunpack.c.l.bf16 %v709
        %v754 = vunpack.c.l.bf16 %v712
        %v755 = vunpack.c.h.bf16 %v709
        %v756 = vunpack.c.h.bf16 %v712
        %v757 = vunpack.c.l.bf16 %v715
        %v758 = vunpack.c.l.bf16 %v718
        %v759 = vunpack.c.h.bf16 %v715
        %v760 = vunpack.c.h.bf16 %v718
        %v761 = vunpack.c.l.bf16 %v721
        %v762 = vunpack.c.l.bf16 %v724
        %v763 = vunpack.c.h.bf16 %v721
        %v764 = vunpack.c.h.bf16 %v724
        %v765 = vunpack.c.l.bf16 %v727
        %v766 = vunpack.c.l.bf16 %v730
        %v767 = vunpack.c.h.bf16 %v727
        %v768 = vunpack.c.h.bf16 %v730
        %v769 = vunpack.c.l.bf16 %v733
        %v770 = vunpack.c.l.bf16 %v736
        %v771 = vunpack.c.h.bf16 %v733
        %v772 = vunpack.c.h.bf16 %v736
        %v773 = vunpack.c.l.bf16 %v739
        %v774 = vunpack.c.l.bf16 %v742
        %v775 = vunpack.c.h.bf16 %v739
        %v776 = vunpack.c.h.bf16 %v742
        %v777 = vunpack.c.l.bf16 %v745
        %v778 = vunpack.c.l.bf16 %v748
        %v779 = vunpack.c.h.bf16 %v745
        %v780 = vunpack.c.h.bf16 %v748
        %v781 = vadd.f32 %v749, %v750
        %782 = vadd.xlane.f32.xlu0 %v781
        %v783 = vpop.xlane.xlu0 %782
        %v784 = vadd.f32 %v751, %v752
        %785 = vadd.xlane.f32.xlu0 %v784
        %v786 = vpop.xlane.xlu0 %785
        %v787 = vadd.f32 %v753, %v754
        %788 = vadd.xlane.f32.xlu0 %v787
        %v789 = vpop.xlane.xlu0 %788
        %v790 = vadd.f32 %v755, %v756
        %791 = vadd.xlane.f32.xlu0 %v790
        %v792 = vpop.xlane.xlu0 %791
        %v793 = vadd.f32 %v757, %v758
        %794 = vadd.xlane.f32.xlu0 %v793
        %v795 = vpop.xlane.xlu0 %794
        %v796 = vadd.f32 %v759, %v760
        %797 = vadd.xlane.f32.xlu0 %v796
        %v798 = vpop.xlane.xlu0 %797
        %v799 = vadd.f32 %v761, %v762
        %800 = vadd.xlane.f32.xlu0 %v799
        %v801 = vpop.xlane.xlu0 %800
        %v802 = vadd.f32 %v763, %v764
        %803 = vadd.xlane.f32.xlu0 %v802
        %v804 = vpop.xlane.xlu0 %803
        %v805 = vadd.f32 %v765, %v766
        %806 = vadd.xlane.f32.xlu0 %v805
        %v807 = vpop.xlane.xlu0 %806
        %v808 = vadd.f32 %v767, %v768
        %809 = vadd.xlane.f32.xlu0 %v808
        %v810 = vpop.xlane.xlu0 %809
        %v811 = vadd.f32 %v769, %v770
        %812 = vadd.xlane.f32.xlu0 %v811
        %v813 = vpop.xlane.xlu0 %812
        %v814 = vadd.f32 %v771, %v772
        %815 = vadd.xlane.f32.xlu0 %v814
        %v816 = vpop.xlane.xlu0 %815
        %v817 = vadd.f32 %v773, %v774
        %818 = vadd.xlane.f32.xlu0 %v817
        %v819 = vpop.xlane.xlu0 %818
        %v820 = vadd.f32 %v775, %v776
        %821 = vadd.xlane.f32.xlu0 %v820
        %v822 = vpop.xlane.xlu0 %821
        %v823 = vadd.f32 %v777, %v778
        %824 = vadd.xlane.f32.xlu0 %v823
        %v825 = vpop.xlane.xlu0 %824
        %v826 = vadd.f32 %v779, %v780
        %827 = vadd.xlane.f32.xlu0 %v826
        %v828 = vpop.xlane.xlu0 %827
        %v829 = vrcp.pop %v783
        %v830 = vrcp.pop %v786
        %v831 = vrcp.pop %v789
        %v832 = vrcp.pop %v792
        %v833 = vrcp.pop %v795
        %v834 = vrcp.pop %v798
        %v835 = vrcp.pop %v801
        %v836 = vrcp.pop %v804
        %v837 = vrcp.pop %v807
        %v838 = vrcp.pop %v810
        %v839 = vrcp.pop %v813
        %v840 = vrcp.pop %v816
        %v841 = vrcp.pop %v819
        %v842 = vrcp.pop %v822
        %v843 = vrcp.pop %v825
        %v844 = vrcp.pop %v828
        %v845 = vpack.c.bf16 %v830, %v829
        %v846 = vpack.c.bf16 %v832, %v831
        %v847 = vpack.c.bf16 %v834, %v833
        %v848 = vpack.c.bf16 %v836, %v835
        %v849 = vpack.c.bf16 %v838, %v837
        %v850 = vpack.c.bf16 %v840, %v839
        %v851 = vpack.c.bf16 %v842, %v841
        %v852 = vpack.c.bf16 %v844, %v843
        %v853 = vmul.bf16 %v703, %v845
        %v854 = vmul.bf16 %v706, %v845
        %v855 = vmul.bf16 %v709, %v846
        %v856 = vmul.bf16 %v712, %v846
        %v857 = vmul.bf16 %v715, %v847
        %v858 = vmul.bf16 %v718, %v847
        %v859 = vmul.bf16 %v721, %v848
        %v860 = vmul.bf16 %v724, %v848
        %v861 = vmul.bf16 %v727, %v849
        %v862 = vmul.bf16 %v730, %v849
        %v863 = vmul.bf16 %v733, %v850
        %v864 = vmul.bf16 %v736, %v850
        %v865 = vmul.bf16 %v739, %v851
        %v866 = vmul.bf16 %v742, %v851
        %v867 = vmul.bf16 %v745, %v852
        %v868 = vmul.bf16 %v748, %v852
        %v869 = vld [vmem:[%s357] sm:$0xf]
        %v870 = vld [vmem:[%s357 + $0x4] sm:$0xf]
        %v871 = vld [vmem:[%s357 + $0x8] sm:$0xf]
        %v872 = vld [vmem:[%s357 + $0xc] sm:$0xf]
        %v873 = vld [vmem:[%s357 + $0x10] sm:$0xf]
        %v874 = vld [vmem:[%s357 + $0x14] sm:$0xf]
        %v875 = vld [vmem:[%s357 + $0x18] sm:$0xf]
        %v876 = vld [vmem:[%s357 + $0x1c] sm:$0xf]
        %v877 = vld [vmem:[%s357 + $0x20] sm:$0xf]
        %v878 = vld [vmem:[%s357 + $0x24] sm:$0xf]
        %v879 = vld [vmem:[%s357 + $0x28] sm:$0xf]
        %v880 = vld [vmem:[%s357 + $0x2c] sm:$0xf]
        %v881 = vld [vmem:[%s357 + $0x30] sm:$0xf]
        %v882 = vld [vmem:[%s357 + $0x34] sm:$0xf]
        %v883 = vld [vmem:[%s357 + $0x38] sm:$0xf]
        %v884 = vld [vmem:[%s357 + $0x3c] sm:$0xf]
        %v885 = vld [vmem:[%s357 + $0x40] sm:$0xf]
        %v886 = vld [vmem:[%s357 + $0x44] sm:$0xf]
        %v887 = vld [vmem:[%s357 + $0x48] sm:$0xf]
        %v888 = vld [vmem:[%s357 + $0x4c] sm:$0xf]
        %v889 = vld [vmem:[%s357 + $0x50] sm:$0xf]
        %v890 = vld [vmem:[%s357 + $0x54] sm:$0xf]
        %v891 = vld [vmem:[%s357 + $0x58] sm:$0xf]
        %v892 = vld [vmem:[%s357 + $0x5c] sm:$0xf]
        %v893 = vld [vmem:[%s357 + $0x60] sm:$0xf]
        %v894 = vld [vmem:[%s357 + $0x64] sm:$0xf]
        %v895 = vld [vmem:[%s357 + $0x68] sm:$0xf]
        %v896 = vld [vmem:[%s357 + $0x6c] sm:$0xf]
        %v897 = vld [vmem:[%s357 + $0x70] sm:$0xf]
        %v898 = vld [vmem:[%s357 + $0x74] sm:$0xf]
        %v899 = vld [vmem:[%s357 + $0x78] sm:$0xf]
        %v900 = vld [vmem:[%s357 + $0x7c] sm:$0xf]
        %v933 = vunpack.c.l.b16 %v869
        %v934 = vunpack.c.l.b16 %v870
        %v935 = vunpack.c.l.b16 %v871
        %v936 = vunpack.c.l.b16 %v872
        %v937 = vunpack.c.l.b16 %v873
        %v938 = vunpack.c.l.b16 %v874
        %v939 = vunpack.c.l.b16 %v875
        %v940 = vunpack.c.l.b16 %v876
        %v941 = vunpack.c.l.b16 %v877
        %v942 = vunpack.c.l.b16 %v878
        %v943 = vunpack.c.l.b16 %v879
        %v944 = vunpack.c.l.b16 %v880
        %v945 = vunpack.c.l.b16 %v881
        %v946 = vunpack.c.l.b16 %v882
        %v947 = vunpack.c.l.b16 %v883
        %v948 = vunpack.c.l.b16 %v884
        %v949 = vunpack.c.l.b16 %v885
        %v950 = vunpack.c.l.b16 %v886
        %v951 = vunpack.c.l.b16 %v887
        %v952 = vunpack.c.l.b16 %v888
        %v953 = vunpack.c.l.b16 %v889
        %v954 = vunpack.c.l.b16 %v890
        %v955 = vunpack.c.l.b16 %v891
        %v956 = vunpack.c.l.b16 %v892
        %v957 = vunpack.c.l.b16 %v893
        %v958 = vunpack.c.l.b16 %v894
        %v959 = vunpack.c.l.b16 %v895
        %v960 = vunpack.c.l.b16 %v896
        %v961 = vunpack.c.l.b16 %v897
        %v962 = vunpack.c.l.b16 %v898
        %v963 = vunpack.c.l.b16 %v899
        %v964 = vunpack.c.l.b16 %v900
        %v965 = vpack.c.b16 %v934, %v933
        %v966 = vpack.c.b16 %v936, %v935
        %v967 = vpack.c.b16 %v938, %v937
        %v968 = vpack.c.b16 %v940, %v939
        %v969 = vpack.c.b16 %v942, %v941
        %v970 = vpack.c.b16 %v944, %v943
        %v971 = vpack.c.b16 %v946, %v945
        %v972 = vpack.c.b16 %v948, %v947
        %v973 = vpack.c.b16 %v950, %v949
        %v974 = vpack.c.b16 %v952, %v951
        %v975 = vpack.c.b16 %v954, %v953
        %v976 = vpack.c.b16 %v956, %v955
        %v977 = vpack.c.b16 %v958, %v957
        %v978 = vpack.c.b16 %v960, %v959
        %v979 = vpack.c.b16 %v962, %v961
        %v980 = vpack.c.b16 %v964, %v963
        %997 = vmatprep.subr.bf16.mxu0 0
        %998 = vmatpush1.bf16.msra.mxu0 %v972
        %999 = vmatprep.subr.bf16.mxu0 0
        %1000 = vmatpush1.bf16.msra.mxu0 %v971
        %1001 = vmatprep.subr.bf16.mxu0 0
        %1002 = vmatpush1.bf16.msra.mxu0 %v970
        %1003 = vmatprep.subr.bf16.mxu0 0
        %1004 = vmatpush1.bf16.msra.mxu0 %v969
        %1005 = vmatprep.subr.bf16.mxu0 0
        %1006 = vmatpush1.bf16.msra.mxu0 %v968
        %1007 = vmatprep.subr.bf16.mxu0 0
        %1008 = vmatpush1.bf16.msra.mxu0 %v967
        %1009 = vmatprep.subr.bf16.mxu0 0
        %1010 = vmatpush1.bf16.msra.mxu0 %v966
        %1011 = vmatprep.subr.bf16.mxu0 0
        %1012 = vmatpush1.bf16.msra.mxu0 %v965
        %1013 = vmatprep.subr.bf16.mxu0 0
        %1014 = vmatpush2.bf16.msra.mxu0 %v980
        %1015 = vmatprep.subr.bf16.mxu0 0
        %1016 = vmatpush2.bf16.msra.mxu0 %v979
        %1017 = vmatprep.subr.bf16.mxu0 0
        %1018 = vmatpush2.bf16.msra.mxu0 %v978
        %1019 = vmatprep.subr.bf16.mxu0 0
        %1020 = vmatpush2.bf16.msra.mxu0 %v977
        %1021 = vmatprep.subr.bf16.mxu0 0
        %1022 = vmatpush2.bf16.msra.mxu0 %v976
        %1023 = vmatprep.subr.bf16.mxu0 0
        %1024 = vmatpush2.bf16.msra.mxu0 %v975
        %1025 = vmatprep.subr.bf16.mxu0 0
        %1026 = vmatpush2.bf16.msra.mxu0 %v974
        %1027 = vmatprep.subr.bf16.mxu0 0
        %1028 = vmatpush2.bf16.msra.mxu0 %v973
        %1029 = vmatprep.mubr.bf16.mxu0 %v854
        %1030 = vmatmul.mubr.bf16.gmra.mxu0 %v853
        %v1031 = vpop.f32.mrf.mxu0
        %v1032 = vadd.f32 0.0, %v1031
        %v1033 = vpop.f32.mrf.mxu0
        %v1034 = vpop.f32.mrf.mxu0
        %v1035 = vadd.f32 0.0, %v1034
        %v1036 = vpop.f32.mrf.mxu0
        %1037 = vmatprep.mubr.bf16.mxu0 %v856
        %1038 = vmatmul.mubr.bf16.gmra.mxu0 %v855
        %v1039 = vpop.f32.mrf.mxu0
        %v1040 = vadd.f32 0.0, %v1039
        %v1041 = vpop.f32.mrf.mxu0
        %v1042 = vpop.f32.mrf.mxu0
        %v1043 = vadd.f32 0.0, %v1042
        %v1044 = vpop.f32.mrf.mxu0
        %1045 = vmatprep.mubr.bf16.mxu0 %v858
        %1046 = vmatmul.mubr.bf16.gmra.mxu0 %v857
        %v1047 = vpop.f32.mrf.mxu0
        %v1048 = vadd.f32 0.0, %v1047
        %v1049 = vpop.f32.mrf.mxu0
        %v1050 = vpop.f32.mrf.mxu0
        %v1051 = vadd.f32 0.0, %v1050
        %v1052 = vpop.f32.mrf.mxu0
        %1053 = vmatprep.mubr.bf16.mxu0 %v860
        %1054 = vmatmul.mubr.bf16.gmra.mxu0 %v859
        %v1055 = vpop.f32.mrf.mxu0
        %v1056 = vadd.f32 0.0, %v1055
        %v1057 = vpop.f32.mrf.mxu0
        %v1058 = vpop.f32.mrf.mxu0
        %v1059 = vadd.f32 0.0, %v1058
        %v1060 = vpop.f32.mrf.mxu0
        %1061 = vmatprep.mubr.bf16.mxu0 %v862
        %1062 = vmatmul.mubr.bf16.gmra.mxu0 %v861
        %v1063 = vpop.f32.mrf.mxu0
        %v1064 = vadd.f32 0.0, %v1063
        %v1065 = vpop.f32.mrf.mxu0
        %v1066 = vpop.f32.mrf.mxu0
        %v1067 = vadd.f32 0.0, %v1066
        %v1068 = vpop.f32.mrf.mxu0
        %1069 = vmatprep.mubr.bf16.mxu0 %v864
        %1070 = vmatmul.mubr.bf16.gmra.mxu0 %v863
        %v1071 = vpop.f32.mrf.mxu0
        %v1072 = vadd.f32 0.0, %v1071
        %v1073 = vpop.f32.mrf.mxu0
        %v1074 = vpop.f32.mrf.mxu0
        %v1075 = vadd.f32 0.0, %v1074
        %v1076 = vpop.f32.mrf.mxu0
        %1077 = vmatprep.mubr.bf16.mxu0 %v866
        %1078 = vmatmul.mubr.bf16.gmra.mxu0 %v865
        %v1079 = vpop.f32.mrf.mxu0
        %v1080 = vadd.f32 0.0, %v1079
        %v1081 = vpop.f32.mrf.mxu0
        %v1082 = vpop.f32.mrf.mxu0
        %v1083 = vadd.f32 0.0, %v1082
        %v1084 = vpop.f32.mrf.mxu0
        %1085 = vmatprep.mubr.bf16.mxu0 %v868
        %1086 = vmatmul.mubr.bf16.gmra.mxu0 %v867
        %v1087 = vpop.f32.mrf.mxu0
        %v1088 = vadd.f32 0.0, %v1087
        %v1089 = vpop.f32.mrf.mxu0
        %v1090 = vpop.f32.mrf.mxu0
        %v1091 = vadd.f32 0.0, %v1090
        %v1092 = vpop.f32.mrf.mxu0
        %1093 = vdwg.mxu0
        %s1094 = sld [smem:[#allocation2]]
        %v1095 = vstv %s1094
        %v1096 = vmul.f32 %v1095, %v1032
        %v1097 = vmul.f32 %v1095, %v1035
        %v1098 = vmul.f32 %v1095, %v1040
        %v1099 = vmul.f32 %v1095, %v1043
        %v1100 = vmul.f32 %v1095, %v1048
        %v1101 = vmul.f32 %v1095, %v1051
        %v1102 = vmul.f32 %v1095, %v1056
        %v1103 = vmul.f32 %v1095, %v1059
        %v1104 = vmul.f32 %v1095, %v1064
        %v1105 = vmul.f32 %v1095, %v1067
        %v1106 = vmul.f32 %v1095, %v1072
        %v1107 = vmul.f32 %v1095, %v1075
        %v1108 = vmul.f32 %v1095, %v1080
        %v1109 = vmul.f32 %v1095, %v1083
        %v1110 = vmul.f32 %v1095, %v1088
        %v1111 = vmul.f32 %v1095, %v1091
        %v1112 = vld [vmem:[%s366] sm:$0xff]
        %v1113 = vld [vmem:[%s366 + $0x8] sm:$0xff]
        %v1114 = vld [vmem:[%s366 + $0x10] sm:$0xff]
        %v1115 = vld [vmem:[%s366 + $0x18] sm:$0xff]
        %v1116 = vld [vmem:[%s366 + $0x20] sm:$0xff]
        %v1117 = vld [vmem:[%s366 + $0x28] sm:$0xff]
        %v1118 = vld [vmem:[%s366 + $0x30] sm:$0xff]
        %v1119 = vld [vmem:[%s366 + $0x38] sm:$0xff]
        %v1120 = vld [vmem:[%s366 + $0x40] sm:$0xff]
        %v1121 = vld [vmem:[%s366 + $0x48] sm:$0xff]
        %v1122 = vld [vmem:[%s366 + $0x50] sm:$0xff]
        %v1123 = vld [vmem:[%s366 + $0x58] sm:$0xff]
        %v1124 = vld [vmem:[%s366 + $0x60] sm:$0xff]
        %v1125 = vld [vmem:[%s366 + $0x68] sm:$0xff]
        %v1126 = vld [vmem:[%s366 + $0x70] sm:$0xff]
        %v1127 = vld [vmem:[%s366 + $0x78] sm:$0xff]
        %v1128 = vadd.f32 %v1096, %v1112
        %v1129 = vadd.f32 %v1097, %v1113
        %v1130 = vadd.f32 %v1098, %v1114
        %v1131 = vadd.f32 %v1099, %v1115
        %v1132 = vadd.f32 %v1100, %v1116
        %v1133 = vadd.f32 %v1101, %v1117
        %v1134 = vadd.f32 %v1102, %v1118
        %v1135 = vadd.f32 %v1103, %v1119
        %v1136 = vadd.f32 %v1104, %v1120
        %v1137 = vadd.f32 %v1105, %v1121
        %v1138 = vadd.f32 %v1106, %v1122
        %v1139 = vadd.f32 %v1107, %v1123
        %v1140 = vadd.f32 %v1108, %v1124
        %v1141 = vadd.f32 %v1109, %v1125
        %v1142 = vadd.f32 %v1110, %v1126
        %v1143 = vadd.f32 %v1111, %v1127
        %vm1144 = vcmask 130048
        %1145 = vst.msk [vmem:[%s376] sm:$0xff] %vm1144, %v1128
        %1146 = vst.msk [vmem:[%s376 + $0x8] sm:$0xff] %vm1144, %v1129
        %1147 = vst.msk [vmem:[%s376 + $0x10] sm:$0xff] %vm1144, %v1130
        %1148 = vst.msk [vmem:[%s376 + $0x18] sm:$0xff] %vm1144, %v1131
        %1149 = vst.msk [vmem:[%s376 + $0x20] sm:$0xff] %vm1144, %v1132
        %1150 = vst.msk [vmem:[%s376 + $0x28] sm:$0xff] %vm1144, %v1133
        %1151 = vst.msk [vmem:[%s376 + $0x30] sm:$0xff] %vm1144, %v1134
        %1152 = vst.msk [vmem:[%s376 + $0x38] sm:$0xff] %vm1144, %v1135
        %1153 = vst.msk [vmem:[%s376 + $0x40] sm:$0xff] %vm1144, %v1136
        %1154 = vst.msk [vmem:[%s376 + $0x48] sm:$0xff] %vm1144, %v1137
        %1155 = vst.msk [vmem:[%s376 + $0x50] sm:$0xff] %vm1144, %v1138
        %1156 = vst.msk [vmem:[%s376 + $0x58] sm:$0xff] %vm1144, %v1139
        %1157 = vst.msk [vmem:[%s376 + $0x60] sm:$0xff] %vm1144, %v1140
        %1158 = vst.msk [vmem:[%s376 + $0x68] sm:$0xff] %vm1144, %v1141
        %1159 = vst.msk [vmem:[%s376 + $0x70] sm:$0xff] %vm1144, %v1142
        %1160 = vst.msk [vmem:[%s376 + $0x78] sm:$0xff] %vm1144, %v1143
        %v1177 = vunpack.c.l.b16 %v853
        %v1178 = vunpack.c.l.b16 %v854
        %v1179 = vunpack.c.h.b16 %v853
        %v1180 = vunpack.c.h.b16 %v854
        %v1181 = vunpack.c.l.b16 %v855
        %v1182 = vunpack.c.l.b16 %v856
        %v1183 = vunpack.c.h.b16 %v855
        %v1184 = vunpack.c.h.b16 %v856
        %v1185 = vunpack.c.l.b16 %v857
        %v1186 = vunpack.c.l.b16 %v858
        %v1187 = vunpack.c.h.b16 %v857
        %v1188 = vunpack.c.h.b16 %v858
        %v1189 = vunpack.c.l.b16 %v859
        %v1190 = vunpack.c.l.b16 %v860
        %v1191 = vunpack.c.h.b16 %v859
        %v1192 = vunpack.c.h.b16 %v860
        %v1193 = vunpack.c.l.b16 %v861
        %v1194 = vunpack.c.l.b16 %v862
        %v1195 = vunpack.c.h.b16 %v861
        %v1196 = vunpack.c.h.b16 %v862
        %v1197 = vunpack.c.l.b16 %v863
        %v1198 = vunpack.c.l.b16 %v864
        %v1199 = vunpack.c.h.b16 %v863
        %v1200 = vunpack.c.h.b16 %v864
        %v1201 = vunpack.c.l.b16 %v865
        %v1202 = vunpack.c.l.b16 %v866
        %v1203 = vunpack.c.h.b16 %v865
        %v1204 = vunpack.c.h.b16 %v866
        %v1205 = vunpack.c.l.b16 %v867
        %v1206 = vunpack.c.l.b16 %v868
        %v1207 = vunpack.c.h.b16 %v867
        %v1208 = vunpack.c.h.b16 %v868
        %v1209 = vpack.c.b16 %v1178, %v1177
        %v1210 = vpack.c.b16 %v1180, %v1179
        %v1211 = vpack.c.b16 %v1182, %v1181
        %v1212 = vpack.c.b16 %v1184, %v1183
        %v1213 = vpack.c.b16 %v1186, %v1185
        %v1214 = vpack.c.b16 %v1188, %v1187
        %v1215 = vpack.c.b16 %v1190, %v1189
        %v1216 = vpack.c.b16 %v1192, %v1191
        %v1217 = vpack.c.b16 %v1194, %v1193
        %v1218 = vpack.c.b16 %v1196, %v1195
        %v1219 = vpack.c.b16 %v1198, %v1197
        %v1220 = vpack.c.b16 %v1200, %v1199
        %v1221 = vpack.c.b16 %v1202, %v1201
        %v1222 = vpack.c.b16 %v1204, %v1203
        %v1223 = vpack.c.b16 %v1206, %v1205
        %v1224 = vpack.c.b16 %v1208, %v1207
        %1241 = vst [vmem:[%s338] sm:$0xff] %v1209
        %1242 = vst [vmem:[%s338 + $0x8] sm:$0xff] %v1210
        %1243 = vst [vmem:[%s338 + $0x10] sm:$0xff] %v1211
        %1244 = vst [vmem:[%s338 + $0x18] sm:$0xff] %v1212
        %1245 = vst [vmem:[%s338 + $0x20] sm:$0xff] %v1213
        %1246 = vst [vmem:[%s338 + $0x28] sm:$0xff] %v1214
        %1247 = vst [vmem:[%s338 + $0x30] sm:$0xff] %v1215
        %1248 = vst [vmem:[%s338 + $0x38] sm:$0xff] %v1216
        %1249 = vst [vmem:[%s338 + $0x40] sm:$0xff] %v1217
        %1250 = vst [vmem:[%s338 + $0x48] sm:$0xff] %v1218
        %1251 = vst [vmem:[%s338 + $0x50] sm:$0xff] %v1219
        %1252 = vst [vmem:[%s338 + $0x58] sm:$0xff] %v1220
        %1253 = vst [vmem:[%s338 + $0x60] sm:$0xff] %v1221
        %1254 = vst [vmem:[%s338 + $0x68] sm:$0xff] %v1222
        %1255 = vst [vmem:[%s338 + $0x70] sm:$0xff] %v1223
        %1256 = vst [vmem:[%s338 + $0x78] sm:$0xff] %v1224
        %s1257 = smul.u32 16, %s27
        %p1258 = scmp.lt.s32.totalorder %s26, 1
        %s1259 = scalar_select %p1258, %s26, 1
        %p1260 = scmp.lt.s32.totalorder %s1257, 31
        %s1261 = scalar_select %p1260, %s1257, 31
        %s1262 = smul.addr %s1259, 32
        %s1263 = sadd.s32 %s1261, %s1262
        %s1264 = smul.addr %s1263, 8
        %s1265 = scalar_lea.vmem %s5, %s1264
        %s1266 = sand.u32 %s201, 1
        %s1267 = scalar_lea.sflag [#allocation4], %s1266
        %s1268 = sand.u32 %s201, 1
        %s1269 = smul.addr %s1268, 128
        %s1270 = scalar_lea.vmem [#allocation3], %s1269
        // Predicated region
        $region41: #{tpu_custom_call.1} parent=39 // pred_check
          %p1271 = pneg %p183
        $region42: #{tpu_custom_call.1} parent=39 // pred_check_branch
          %1273 = sbr.rel (%p1271) target = $region44
        $region43: #{tpu_custom_call.1} parent=39 // pred_region
          %s1274 = smul.u32 16, %s27
        $region44: #{tpu_custom_call.1} parent=39 // pred_fallthru
          _
        // Predicated region
        $region45: #{tpu_custom_call.1} parent=39 // pred_check
          %p1275 = pneg %p211
        $region46: #{tpu_custom_call.1} parent=39 // pred_check_branch
          %1277 = sbr.rel (%p1275) target = $region48
        $region47: #{tpu_custom_call.1} parent=39 // pred_region
          %s1278 = smul.u32 16, %s27
          %s1280 = ssub.s32 2048, 2048
          %1281 = vsyncadd %s1267, %s1280
          %s1282 = smul.addr %s1278, 2
          %s1283 = smul.addr %s26, 64
          %s1284 = sadd.s32 %s1282, %s1283
          %s1285 = smul.addr %s1284, 64
          %s1286 = scalar_lea.hbm %s6, %s1285
          %s1287 = sshll.u32 %s1270, 4
          %s1288 = int_to_ptr.vmem [resolvable:$true] %s1287
          %1293 = dma.vmem_to_hbm [thread:$0]  %s1288, 2048, %s1286, %s1267, 128, 128, 8
        $region48: #{tpu_custom_call.1} parent=39 // pred_fallthru
          _
      $region40: #{tpu_custom_call.1} parent=5 // pred_fallthru
        _
      %p1294 = scmp.le.s32.totalorder 2, %s17
      // Predicated region
      $region49: #{tpu_custom_call.1} parent=5 // pred_check
        %p1295 = pneg %p1294
      $region50: #{tpu_custom_call.1} parent=5 // pred_check_branch
        %1297 = sbr.rel (%p1295) target = $region52
      $region51: #{tpu_custom_call.1} parent=5 // pred_region
        %s1298 = ssub.s32 %s17, 2
        // Predicated region
        $region53: #{tpu_custom_call.1} parent=51 // pred_check
          %p1299 = pneg %p189
        $region54: #{tpu_custom_call.1} parent=51 // pred_check_branch
          %1301 = sbr.rel (%p1299) target = $region56
        $region55: #{tpu_custom_call.1} parent=51 // pred_region
          %s1302 = smul.u32 16, %s29
          %p1303 = scmp.lt.s32.totalorder %s28, 1
          %s1304 = scalar_select %p1303, %s28, 1
          %p1305 = scmp.lt.s32.totalorder %s1302, 31
          %s1306 = scalar_select %p1305, %s1302, 31
          %s1307 = smul.addr %s1304, 32
          %s1308 = sadd.s32 %s1306, %s1307
          %s1309 = smul.addr %s1308, 8
          %s1310 = scalar_lea.vmem %s5, %s1309
        $region56: #{tpu_custom_call.1} parent=51 // pred_fallthru
          _
        // Predicated region
        $region57: #{tpu_custom_call.1} parent=51 // pred_check
          %p1311 = pneg %p217
        $region58: #{tpu_custom_call.1} parent=51 // pred_check_branch
          %1313 = sbr.rel (%p1311) target = $region60
        $region59: #{tpu_custom_call.1} parent=51 // pred_region
          %s1314 = sand.u32 %s202, 1
          %s1315 = scalar_lea.sflag [#allocation4], %s1314
          %s1316 = sand.u32 %s202, 1
          %s1317 = smul.addr %s1316, 128
          %s1318 = scalar_lea.vmem [#allocation3], %s1317
          %1319 = dma.done %s1315, 2048
        $region60: #{tpu_custom_call.1} parent=51 // pred_fallthru
          _
      $region52: #{tpu_custom_call.1} parent=5 // pred_fallthru
        _
    $region6: #{tpu_custom_call.1} parent=1 // loop_footer
      %s21 = sadd.s32 1, %s17
    $region7: #{tpu_custom_call.1} parent=1 // loop_footer_branch
      %16 = sbr.rel target = $region3
    $region8: #{tpu_custom_call.1} parent=1 // loop_exit
      _
    %1320 = vsyncpa [#allocation4], 1
    %s1321 = scalar_lea.sflag [#allocation4], 1
    %1322 = vsyncpa %s1321, 1

</llo_original>
